<compile_context>
chip_gen: v7x
topology: tpu7x:2x2x1
jax: 0.10.0
libtpu: 0.0.40
codegen_flags: <defaults>
</compile_context>

<pallas_src>
import jax
import jax.numpy as jnp
from jax.experimental import pallas as pl
from jax.experimental.pallas import tpu as pltpu

INPUT_DIM = 24     # data[:, :-11] -> small synthetic feature count
LATENT_DIM = 16
H1, H2 = 64, 32
BATCH = 8

# ---- packed-parameter layout ------------------------------------------------
_N_LAYERS = 6      # enc1, enc2, fused mu|logvar head, dec1, dec2, dec3
_WPAD = 64         # every weight zero-padded to (64, 64); biases to 64 lanes
_LAYER_DIMS = (    # true (in, out) of each packed layer
    (INPUT_DIM, H1),
    (H1, H2),
    (H2, 2 * LATENT_DIM),
    (LATENT_DIM, H2),
    (H2, H1),
    (H1, INPUT_DIM),
)
IN_SLAB = INPUT_DIM + LATENT_DIM        # 40 lanes: x | eps
OUT_SLAB = INPUT_DIM + 2 * LATENT_DIM   # 56 lanes: recon | mu | logvar
_X32 = 32          # first 32 slab lanes fed to layer 0 (bf16 sublane-aligned)
_BM_CAP = 4096     # max batch-tile rows


def _vae_kernel(xe_ref, w_ref, b_ref, out_ref):
    xe = xe_ref[...]                              # (bm, 40) f32 : [x | eps]
    eps = xe[:, INPUT_DIM:IN_SLAB]                # (bm, 16) f32

    def mm(a, i):
        # full padded 64x64 bf16 matmul, f32 accumulation on the MXU
        return jnp.dot(a.astype(jnp.bfloat16), w_ref[i],
                       preferred_element_type=jnp.float32)

    # ---- encoder: Linear(24,64)+ReLU, Linear(64,32)+ReLU ----
    # Layer 0 feeds the first 32 slab lanes (x plus 8 eps lanes); rows 24..31
    # of the packed layer-0 weight are zero, so the eps lanes contribute 0.
    x32 = xe[:, :_X32].astype(jnp.bfloat16)
    h = jnp.dot(x32, w_ref[0, :_X32, :],
                preferred_element_type=jnp.float32) + b_ref[0:1, :]
    h = jnp.maximum(h, 0.0)
    h = jnp.maximum(mm(h, 1) + b_ref[1:2, :], 0.0)

    # ---- fused mu|logvar head: one padded 64-wide matmul ----
    mulv = mm(h, 2) + b_ref[2:3, :]               # lanes 0..31 real, rest 0
    mu = mulv[:, :LATENT_DIM]
    logvar = mulv[:, LATENT_DIM:2 * LATENT_DIM]

    # ---- reparameterize (f32 on VPU/EUP): z = mu + eps * exp(0.5 * logvar) ----
    z = mu + eps * jnp.exp(0.5 * logvar)

    # ---- decoder: Linear(16,32)+ReLU, Linear(32,64)+ReLU, Linear(64,24) ----
    d = jnp.dot(z.astype(jnp.bfloat16), w_ref[3, :LATENT_DIM, :],
                preferred_element_type=jnp.float32) + b_ref[3:4, :]
    d = jnp.maximum(d, 0.0)
    d = jnp.maximum(mm(d, 4) + b_ref[4:5, :], 0.0)
    recon = mm(d, 5) + b_ref[5:6, :]              # lanes 0..23 real, rest 0

    # single lane-contiguous output slab: recon | (mu|logvar already contiguous)
    out_ref[...] = jnp.concatenate(
        [recon[:, :INPUT_DIM], mulv[:, :2 * LATENT_DIM]], axis=-1)


def pack_params(params, weight_dtype=jnp.bfloat16):
    """Pack the 14 per-layer arrays into one bf16 weight blob + one f32 bias blob."""
    (w1, b1, w2, b2, wmu, bmu, wlv, blv, wd1, bd1, wd2, bd2, wd3, bd3) = params
    wmulv = jnp.concatenate([wmu, wlv], axis=1)     # (32, 32)
    bmulv = jnp.concatenate([bmu, blv], axis=1)     # (1, 32)
    weights = (w1, w2, wmulv, wd1, wd2, wd3)
    biases = (b1, b2, bmulv, bd1, bd2, bd3)

    wblob = jnp.zeros((_N_LAYERS, _WPAD, _WPAD), weight_dtype)
    bblob = jnp.zeros((_N_LAYERS, _WPAD), jnp.float32)
    for i, (w, b) in enumerate(zip(weights, biases)):
        wblob = wblob.at[i, :w.shape[0], :w.shape[1]].set(w.astype(weight_dtype))
        bblob = bblob.at[i, :b.shape[1]].set(b[0].astype(jnp.float32))
    return wblob, bblob


def _round_up(n, m):
    return ((n + m - 1) // m) * m


def _num_tensorcores():
    """Best-effort TensorCore-per-chip count (2 on v7x, 1 on v5e/v6e)."""
    try:
        dev = jax.devices()[0]
    except Exception:
        return 1
    n = int(getattr(dev, "num_cores", 1) or 1)
    kind = str(getattr(dev, "device_kind", "")).lower()
    if "v7" in kind:
        n = max(n, 2)
    return max(1, n)


def vae_forward(x, eps, wblob, bblob):
    """Whole VAE forward in one pallas_call, tiled over the batch."""
    B, D = x.shape
    assert D == INPUT_DIM and eps.shape == (B, LATENT_DIM)

    # fused (B, 40) input slab [x | eps] -> one input DMA stream per step
    xe = jnp.concatenate([x, eps], axis=-1)

    # Generation-aware tiling: single-TC chips (v5e/v6e) prefer ONE big tile;
    # v7x prefers >=2 "parallel" tiles so both TensorCores get work.
    n_cores = _num_tensorcores()
    steps = max(n_cores, pl.cdiv(B, _BM_CAP))
    bm = max(8, min(_round_up(pl.cdiv(B, steps), 8), _round_up(B, 8)))
    grid = (pl.cdiv(B, bm),)

    flops = 2 * B * sum(i * o for i, o in _LAYER_DIMS)
    bytes_accessed = (xe.size * xe.dtype.itemsize
                      + wblob.size * wblob.dtype.itemsize
                      + bblob.size * bblob.dtype.itemsize
                      + B * OUT_SLAB * 4)
    cost = pl.CostEstimate(flops=flops,
                           transcendentals=B * LATENT_DIM,
                           bytes_accessed=bytes_accessed)

    slab = pl.pallas_call(
        _vae_kernel,
        out_shape=jax.ShapeDtypeStruct((B, OUT_SLAB), jnp.float32),
        grid_spec=pltpu.PrefetchScalarGridSpec(
            num_scalar_prefetch=0,
            grid=grid,
            in_specs=[
                pl.BlockSpec((bm, IN_SLAB), lambda i: (i, 0)),                 # x|eps
                pl.BlockSpec((_N_LAYERS, _WPAD, _WPAD), lambda i: (0, 0, 0)),  # weights
                pl.BlockSpec((_N_LAYERS, _WPAD), lambda i: (0, 0)),            # biases
            ],
            out_specs=pl.BlockSpec((bm, OUT_SLAB), lambda i: (i, 0)),
        ),
        compiler_params=pltpu.CompilerParams(
            dimension_semantics=("parallel",)),
        cost_estimate=cost,
    )(xe, wblob, bblob)

    recon = slab[:, :INPUT_DIM]
    mu = slab[:, INPUT_DIM:INPUT_DIM + LATENT_DIM]
    logvar = slab[:, INPUT_DIM + LATENT_DIM:]
    return recon, mu, logvar


def init_params(key):
    """Deterministic init; weights stored as [in, out] (transpose of nn.Linear)."""
    def linear(key, fan_in, fan_out):
        kw, kb = jax.random.split(key)
        bound = 1.0 / jnp.sqrt(fan_in)
        w = jax.random.uniform(kw, (fan_in, fan_out), jnp.float32, -bound, bound)
        b = jax.random.uniform(kb, (1, fan_out), jnp.float32, -bound, bound)
        return w, b

    keys = jax.random.split(key, 7)
    w1, b1 = linear(keys[0], INPUT_DIM, H1)
    w2, b2 = linear(keys[1], H1, H2)
    wmu, bmu = linear(keys[2], H2, LATENT_DIM)
    wlv, blv = linear(keys[3], H2, LATENT_DIM)
    wd1, bd1 = linear(keys[4], LATENT_DIM, H2)
    wd2, bd2 = linear(keys[5], H2, H1)
    wd3, bd3 = linear(keys[6], H1, INPUT_DIM)
    return (w1, b1, w2, b2, wmu, bmu, wlv, blv, wd1, bd1, wd2, bd2, wd3, bd3)


def vae_forward_ref(x, eps, params, matmul_dtype=jnp.bfloat16):
    """Pure-JAX reference with matching matmul precision (bf16 operands, f32 acc)."""
    def mm(a, w):
        return jnp.dot(a.astype(matmul_dtype), w.astype(matmul_dtype),
                       preferred_element_type=jnp.float32)

    (w1, b1, w2, b2, wmu, bmu, wlv, blv, wd1, bd1, wd2, bd2, wd3, bd3) = params
    h = jax.nn.relu(mm(x, w1) + b1)
    h = jax.nn.relu(mm(h, w2) + b2)
    mu = mm(h, wmu) + bmu
    logvar = mm(h, wlv) + blv
    z = mu + eps * jnp.exp(0.5 * logvar)
    d = jax.nn.relu(mm(z, wd1) + bd1)
    d = jax.nn.relu(mm(d, wd2) + bd2)
    recon = mm(d, wd3) + bd3
    return recon, mu, logvar


if __name__ == "__main__":
    key = jax.random.PRNGKey(0)
    kx, keps, kp = jax.random.split(key, 3)

    x = jax.random.normal(kx, (BATCH, INPUT_DIM), jnp.float32)
    # torch.randn_like(std) -> explicit deterministic noise passed into the kernel.
    eps = jax.random.normal(keps, (BATCH, LATENT_DIM), jnp.float32)
    params = init_params(kp)
    wblob, bblob = pack_params(params)

    recon, mu, logvar = jax.block_until_ready(vae_forward(x, eps, wblob, bblob))

    recon_r, mu_r, logvar_r = vae_forward_ref(x, eps, params)
    assert recon.shape == (BATCH, INPUT_DIM)
    assert mu.shape == (BATCH, LATENT_DIM) and logvar.shape == (BATCH, LATENT_DIM)
    # bf16 matmul operands (f32 accumulate) -> relaxed tolerances vs. the
    # matching-precision reference, per review guidance.
    assert jnp.allclose(recon, recon_r, atol=2e-2, rtol=2e-2)
    assert jnp.allclose(mu, mu_r, atol=2e-2, rtol=2e-2)
    assert jnp.allclose(logvar, logvar_r, atol=2e-2, rtol=2e-2)

    print("KERNEL_OK")
</pallas_src>

<mosaic_0001>
module attributes {stable_mosaic.version = 11 : i64} {
  func.func @_vae_kernel(%arg0: i32, %arg1: memref<8x40xf32, #tpu.memory_space<vmem>>, %arg2: memref<6x64x64xbf16, #tpu.memory_space<vmem>>, %arg3: memref<6x64xf32, #tpu.memory_space<vmem>>, %arg4: memref<8x56xf32, #tpu.memory_space<vmem>>) attributes {dimension_semantics = [#tpu.dimension_semantics<parallel>], iteration_bounds = array<i64: 1>, scalar_prefetch = 0 : i64, scratch_operands = 0 : i64, tpu.core_type = #tpu.core_type<tc>, window_params = [{transform_indices = @transform_0, window_bounds = array<i64: 8, 40>}, {pipeline_mode = #tpu.pipeline_mode<synchronous>, transform_indices = @transform_1, window_bounds = array<i64: 6, 64, 64>}, {pipeline_mode = #tpu.pipeline_mode<synchronous>, transform_indices = @transform_2, window_bounds = array<i64: 6, 64>}, {transform_indices = @transform_3, window_bounds = array<i64: 8, 56>}]} {
    %c0 = arith.constant 0 : index
    %c0_0 = arith.constant 0 : index
    %0 = vector.load %arg1[%c0, %c0_0] : memref<8x40xf32, #tpu.memory_space<vmem>>, vector<8x40xf32>
    %1 = vector.extract_strided_slice %0 {offsets = [0, 24], sizes = [8, 16], strides = [1, 1]} : vector<8x40xf32> to vector<8x16xf32>
    %2 = vector.extract_strided_slice %0 {offsets = [0, 0], sizes = [8, 32], strides = [1, 1]} : vector<8x40xf32> to vector<8x32xf32>
    %3 = arith.truncf %2 : vector<8x32xf32> to vector<8x32xbf16>
    %c0_1 = arith.constant 0 : index
    %c0_2 = arith.constant 0 : index
    %c0_3 = arith.constant 0 : index
    %4 = vector.load %arg2[%c0_1, %c0_2, %c0_3] : memref<6x64x64xbf16, #tpu.memory_space<vmem>>, vector<1x32x64xbf16>
    %5 = vector.shape_cast %4 : vector<1x32x64xbf16> to vector<32x64xbf16>
    %cst = arith.constant dense<0.000000e+00> : vector<8x64xf32>
    %6 = tpu.matmul %3, %5, %cst {dimension_numbers = #tpu.dot_dimension_numbers<[1], [0], [0], [1], [0, 0, 1, 1], [], []>} : vector<8x32xbf16>, vector<32x64xbf16>, vector<8x64xf32> -> vector<8x64xf32>
    %c0_4 = arith.constant 0 : index
    %c0_5 = arith.constant 0 : index
    %7 = vector.load %arg3[%c0_4, %c0_5] : memref<6x64xf32, #tpu.memory_space<vmem>>, vector<1x64xf32>
    %8 = vector.broadcast %7 : vector<1x64xf32> to vector<8x64xf32>
    %9 = arith.addf %6, %8 : vector<8x64xf32>
    %cst_6 = arith.constant 0.000000e+00 : f32
    %10 = vector.broadcast %cst_6 : f32 to vector<8x64xf32>
    %11 = arith.maximumf %9, %10 : vector<8x64xf32>
    %12 = arith.truncf %11 : vector<8x64xf32> to vector<8x64xbf16>
    %c1 = arith.constant 1 : index
    %c0_7 = arith.constant 0 : index
    %c0_8 = arith.constant 0 : index
    %13 = vector.load %arg2[%c1, %c0_7, %c0_8] : memref<6x64x64xbf16, #tpu.memory_space<vmem>>, vector<1x64x64xbf16>
    %14 = vector.shape_cast %13 : vector<1x64x64xbf16> to vector<64x64xbf16>
    %cst_9 = arith.constant dense<0.000000e+00> : vector<8x64xf32>
    %15 = tpu.matmul %12, %14, %cst_9 {dimension_numbers = #tpu.dot_dimension_numbers<[1], [0], [0], [1], [0, 0, 1, 1], [], []>} : vector<8x64xbf16>, vector<64x64xbf16>, vector<8x64xf32> -> vector<8x64xf32>
    %c1_10 = arith.constant 1 : index
    %c0_11 = arith.constant 0 : index
    %16 = vector.load %arg3[%c1_10, %c0_11] : memref<6x64xf32, #tpu.memory_space<vmem>>, vector<1x64xf32>
    %17 = vector.broadcast %16 : vector<1x64xf32> to vector<8x64xf32>
    %18 = arith.addf %15, %17 : vector<8x64xf32>
    %cst_12 = arith.constant 0.000000e+00 : f32
    %19 = vector.broadcast %cst_12 : f32 to vector<8x64xf32>
    %20 = arith.maximumf %18, %19 : vector<8x64xf32>
    %21 = arith.truncf %20 : vector<8x64xf32> to vector<8x64xbf16>
    %c2 = arith.constant 2 : index
    %c0_13 = arith.constant 0 : index
    %c0_14 = arith.constant 0 : index
    %22 = vector.load %arg2[%c2, %c0_13, %c0_14] : memref<6x64x64xbf16, #tpu.memory_space<vmem>>, vector<1x64x64xbf16>
    %23 = vector.shape_cast %22 : vector<1x64x64xbf16> to vector<64x64xbf16>
    %cst_15 = arith.constant dense<0.000000e+00> : vector<8x64xf32>
    %24 = tpu.matmul %21, %23, %cst_15 {dimension_numbers = #tpu.dot_dimension_numbers<[1], [0], [0], [1], [0, 0, 1, 1], [], []>} : vector<8x64xbf16>, vector<64x64xbf16>, vector<8x64xf32> -> vector<8x64xf32>
    %c2_16 = arith.constant 2 : index
    %c0_17 = arith.constant 0 : index
    %25 = vector.load %arg3[%c2_16, %c0_17] : memref<6x64xf32, #tpu.memory_space<vmem>>, vector<1x64xf32>
    %26 = vector.broadcast %25 : vector<1x64xf32> to vector<8x64xf32>
    %27 = arith.addf %24, %26 : vector<8x64xf32>
    %28 = vector.extract_strided_slice %27 {offsets = [0, 0], sizes = [8, 16], strides = [1, 1]} : vector<8x64xf32> to vector<8x16xf32>
    %29 = vector.extract_strided_slice %27 {offsets = [0, 16], sizes = [8, 16], strides = [1, 1]} : vector<8x64xf32> to vector<8x16xf32>
    %cst_18 = arith.constant 5.000000e-01 : f32
    %30 = vector.broadcast %cst_18 : f32 to vector<8x16xf32>
    %31 = arith.mulf %30, %29 : vector<8x16xf32>
    %32 = math.exp %31 : vector<8x16xf32>
    %33 = arith.mulf %1, %32 : vector<8x16xf32>
    %34 = arith.addf %28, %33 : vector<8x16xf32>
    %35 = arith.truncf %34 : vector<8x16xf32> to vector<8x16xbf16>
    %c3 = arith.constant 3 : index
    %c0_19 = arith.constant 0 : index
    %c0_20 = arith.constant 0 : index
    %36 = vector.load %arg2[%c3, %c0_19, %c0_20] : memref<6x64x64xbf16, #tpu.memory_space<vmem>>, vector<1x16x64xbf16>
    %37 = vector.shape_cast %36 : vector<1x16x64xbf16> to vector<16x64xbf16>
    %cst_21 = arith.constant dense<0.000000e+00> : vector<8x64xf32>
    %38 = tpu.matmul %35, %37, %cst_21 {dimension_numbers = #tpu.dot_dimension_numbers<[1], [0], [0], [1], [0, 0, 1, 1], [], []>} : vector<8x16xbf16>, vector<16x64xbf16>, vector<8x64xf32> -> vector<8x64xf32>
    %c3_22 = arith.constant 3 : index
    %c0_23 = arith.constant 0 : index
    %39 = vector.load %arg3[%c3_22, %c0_23] : memref<6x64xf32, #tpu.memory_space<vmem>>, vector<1x64xf32>
    %40 = vector.broadcast %39 : vector<1x64xf32> to vector<8x64xf32>
    %41 = arith.addf %38, %40 : vector<8x64xf32>
    %cst_24 = arith.constant 0.000000e+00 : f32
    %42 = vector.broadcast %cst_24 : f32 to vector<8x64xf32>
    %43 = arith.maximumf %41, %42 : vector<8x64xf32>
    %44 = arith.truncf %43 : vector<8x64xf32> to vector<8x64xbf16>
    %c4 = arith.constant 4 : index
    %c0_25 = arith.constant 0 : index
    %c0_26 = arith.constant 0 : index
    %45 = vector.load %arg2[%c4, %c0_25, %c0_26] : memref<6x64x64xbf16, #tpu.memory_space<vmem>>, vector<1x64x64xbf16>
    %46 = vector.shape_cast %45 : vector<1x64x64xbf16> to vector<64x64xbf16>
    %cst_27 = arith.constant dense<0.000000e+00> : vector<8x64xf32>
    %47 = tpu.matmul %44, %46, %cst_27 {dimension_numbers = #tpu.dot_dimension_numbers<[1], [0], [0], [1], [0, 0, 1, 1], [], []>} : vector<8x64xbf16>, vector<64x64xbf16>, vector<8x64xf32> -> vector<8x64xf32>
    %c4_28 = arith.constant 4 : index
    %c0_29 = arith.constant 0 : index
    %48 = vector.load %arg3[%c4_28, %c0_29] : memref<6x64xf32, #tpu.memory_space<vmem>>, vector<1x64xf32>
    %49 = vector.broadcast %48 : vector<1x64xf32> to vector<8x64xf32>
    %50 = arith.addf %47, %49 : vector<8x64xf32>
    %cst_30 = arith.constant 0.000000e+00 : f32
    %51 = vector.broadcast %cst_30 : f32 to vector<8x64xf32>
    %52 = arith.maximumf %50, %51 : vector<8x64xf32>
    %53 = arith.truncf %52 : vector<8x64xf32> to vector<8x64xbf16>
    %c5 = arith.constant 5 : index
    %c0_31 = arith.constant 0 : index
    %c0_32 = arith.constant 0 : index
    %54 = vector.load %arg2[%c5, %c0_31, %c0_32] : memref<6x64x64xbf16, #tpu.memory_space<vmem>>, vector<1x64x64xbf16>
    %55 = vector.shape_cast %54 : vector<1x64x64xbf16> to vector<64x64xbf16>
    %cst_33 = arith.constant dense<0.000000e+00> : vector<8x64xf32>
    %56 = tpu.matmul %53, %55, %cst_33 {dimension_numbers = #tpu.dot_dimension_numbers<[1], [0], [0], [1], [0, 0, 1, 1], [], []>} : vector<8x64xbf16>, vector<64x64xbf16>, vector<8x64xf32> -> vector<8x64xf32>
    %c5_34 = arith.constant 5 : index
    %c0_35 = arith.constant 0 : index
    %57 = vector.load %arg3[%c5_34, %c0_35] : memref<6x64xf32, #tpu.memory_space<vmem>>, vector<1x64xf32>
    %58 = vector.broadcast %57 : vector<1x64xf32> to vector<8x64xf32>
    %59 = arith.addf %56, %58 : vector<8x64xf32>
    %60 = vector.extract_strided_slice %59 {offsets = [0, 0], sizes = [8, 24], strides = [1, 1]} : vector<8x64xf32> to vector<8x24xf32>
    %61 = vector.extract_strided_slice %27 {offsets = [0, 0], sizes = [8, 32], strides = [1, 1]} : vector<8x64xf32> to vector<8x32xf32>
    %62 = tpu.concatenate %60, %61 in 1 : vector<8x24xf32>, vector<8x32xf32> -> vector<8x56xf32>
    %c0_36 = arith.constant 0 : index
    %c0_37 = arith.constant 0 : index
    %63 = vector.load %arg4[%c0_36, %c0_37] : memref<8x56xf32, #tpu.memory_space<vmem>>, vector<8x56xf32>
    tpu.vector_store %arg4[%c0_36, %c0_37], %62 {strides = array<i32>} : memref<8x56xf32, #tpu.memory_space<vmem>>, vector<8x56xf32>,
    return
  }
  func.func @transform_0(%arg0: i32) -> (i32, i32) {
    %c0_i32 = arith.constant 0 : i32
    %c0_i32_0 = arith.constant 0 : i32
    return %arg0, %c0_i32 : i32, i32
  }
  func.func @transform_1(%arg0: i32) -> (i32, i32, i32) {
    %c0_i32 = arith.constant 0 : i32
    %c0_i32_0 = arith.constant 0 : i32
    %c0_i32_1 = arith.constant 0 : i32
    %c0_i32_2 = arith.constant 0 : i32
    return %c0_i32, %c0_i32_0, %c0_i32_1 : i32, i32, i32
  }
  func.func @transform_2(%arg0: i32) -> (i32, i32) {
    %c0_i32 = arith.constant 0 : i32
    %c0_i32_0 = arith.constant 0 : i32
    %c0_i32_1 = arith.constant 0 : i32
    return %c0_i32, %c0_i32_0 : i32, i32
  }
  func.func @transform_3(%arg0: i32) -> (i32, i32) {
    %c0_i32 = arith.constant 0 : i32
    %c0_i32_0 = arith.constant 0 : i32
    return %arg0, %c0_i32 : i32, i32
  }
}

</mosaic_0001>

<llo_original>
// kernel: tpu_custom_call.1
$region0: #{tpu_custom_call.1}
  #allocation0 [shape = 'u32[]', space=smem, size = 0x4, offset = 0x4, fixed_abs, tag = 'smem constant byte address 0x4 - core index']
  #allocation1 [shape = 'u32[144,128]{1,0:T(1,128)}', space=vmem, size = 0x12000, scoped, tag = 'internal scratch']
  %s0 = inlined_call_operand.hbm [shape: f32[8,40], index: 0, kind: input, shape index: {}]
  %s1 = inlined_call_operand.hbm [shape: bf16[6,64,64], index: 1, kind: input, shape index: {}]
  %s2 = inlined_call_operand.hbm [shape: f32[6,64], index: 2, kind: input, shape index: {}]
  %s3 = inlined_call_operand.hbm [shape: f32[8,56], index: 3, kind: output, shape index: {}]
  %s4 = sld [smem:[#allocation0]]
  $region34: #{tpu_custom_call.1} parent=0
    _
  %s6 = ssub.s32 1, %s4
  %s7 = scalar_select 0, %s6, %s4
  $region1: #{tpu_custom_call.1} parent=0
    #allocation2 [shape = 'u8[4096]{0}', space=vmem, size = 0x1000, scoped, tag = 'input window, operand 0, single buffered']
    #allocation3 [shape = 's32[1]{0}', space=sflag, size = 0x4, scoped, tag = 'scoped memory for tpu_custom_call.1']
    #allocation4 [shape = 's32[1]{0}', space=sflag, size = 0x4, scoped, tag = 'scoped memory for tpu_custom_call.1']
    #allocation5 [shape = 'u8[98304]{0}', space=vmem, size = 0x18000, scoped, tag = 'input window, operand 1, single buffered']
    #allocation6 [shape = 's32[1]{0}', space=sflag, size = 0x4, scoped, tag = 'scoped memory for tpu_custom_call.1']
    #allocation7 [shape = 'u8[4096]{0}', space=vmem, size = 0x1000, scoped, tag = 'input window, operand 2, single buffered']
    #allocation8 [shape = 'u8[4096]{0}', space=vmem, size = 0x1000, scoped, tag = 'output window, operand 0, single buffered']
    %8 = vsyncpa [#allocation3], 0
    %9 = vsyncpa [#allocation6], 0
    %10 = vsyncpa [#allocation4], 0
    // Predicated region
    $region2: #{tpu_custom_call.1} parent=1 // pred_check
      _
    $region3: #{tpu_custom_call.1} parent=1 // pred_check_branch
      %12 = sbr.rel (0) target = $region5
    $region4: #{tpu_custom_call.1} parent=1 // pred_region
      %s14 = ssub.s32 128, 128
      %15 = vsyncadd [#allocation3], %s14
      %s17 = sshll.u32 [#allocation2], 4
      %s18 = int_to_ptr.vmem [resolvable:$true] %s17
      %20 = dma.hbm_to_vmem [thread:$0]  %s0, 128, %s18, [#allocation3]
    $region5: #{tpu_custom_call.1} parent=1 // pred_fallthru
      _
    // Predicated region
    $region6: #{tpu_custom_call.1} parent=1 // pred_check
      _
    $region7: #{tpu_custom_call.1} parent=1 // pred_check_branch
      %22 = sbr.rel (0) target = $region9
    $region8: #{tpu_custom_call.1} parent=1 // pred_region
      %s24 = ssub.s32 3072, 3072
      %25 = vsyncadd [#allocation6], %s24
      %s26 = sshll.u32 [#allocation5], 4
      %s27 = int_to_ptr.vmem [resolvable:$true] %s26
      %32 = dma.hbm_to_vmem [thread:$0]  %s1, 3072, %s27, [#allocation6], 64, 64, 4
    $region9: #{tpu_custom_call.1} parent=1 // pred_fallthru
      _
    // Predicated region
    $region10: #{tpu_custom_call.1} parent=1 // pred_check
      _
    $region11: #{tpu_custom_call.1} parent=1 // pred_check_branch
      %34 = sbr.rel (0) target = $region13
    $region12: #{tpu_custom_call.1} parent=1 // pred_region
      %s36 = ssub.s32 128, 128
      %37 = vsyncadd [#allocation6], %s36
      %s39 = sshll.u32 [#allocation7], 4
      %s40 = int_to_ptr.vmem [resolvable:$true] %s39
      %42 = dma.hbm_to_vmem [thread:$0]  %s2, 128, %s40, [#allocation6]
    $region13: #{tpu_custom_call.1} parent=1 // pred_fallthru
      _
    // Predicated region
    $region14: #{tpu_custom_call.1} parent=1 // pred_check
      _
    $region15: #{tpu_custom_call.1} parent=1 // pred_check_branch
      %44 = sbr.rel (0) target = $region17
    $region16: #{tpu_custom_call.1} parent=1 // pred_region
      %45 = dma.done [#allocation3], 128
    $region17: #{tpu_custom_call.1} parent=1 // pred_fallthru
      _
    // Predicated region
    $region18: #{tpu_custom_call.1} parent=1 // pred_check
      _
    $region19: #{tpu_custom_call.1} parent=1 // pred_check_branch
      %47 = sbr.rel (0) target = $region21
    $region20: #{tpu_custom_call.1} parent=1 // pred_region
      %48 = dma.done [#allocation6], 3072
    $region21: #{tpu_custom_call.1} parent=1 // pred_fallthru
      _
    // Predicated region
    $region22: #{tpu_custom_call.1} parent=1 // pred_check
      _
    $region23: #{tpu_custom_call.1} parent=1 // pred_check_branch
      %50 = sbr.rel (0) target = $region25
    $region24: #{tpu_custom_call.1} parent=1 // pred_region
      %51 = dma.done [#allocation6], 128
    $region25: #{tpu_custom_call.1} parent=1 // pred_fallthru
      _
    %v53 = vld [vmem:[#allocation2] sm:$0xff]
    %v54 = vpack.c.bf16 %v53, %v53
    %v55 = vld [vmem:[#allocation5] sm:$0xf]
    %v56 = vld [vmem:[#allocation5 + $0x4] sm:$0xf]
    %v57 = vld [vmem:[#allocation5 + $0x8] sm:$0xf]
    %v58 = vld [vmem:[#allocation5 + $0xc] sm:$0xf]
    %v59 = vld [vmem:[#allocation7] sm:$0x1]
    %v60 = vlaneseq
    %v61 = vshrl.u32 %v60, 7
    %v62 = vsub.s32 0, %v61
    %v63 = vrot.slane %v59, %v62
    %v68 = vunpack.c.l.b16 %v55
    %v69 = vunpack.c.l.b16 %v56
    %v70 = vunpack.c.l.b16 %v57
    %v71 = vunpack.c.l.b16 %v58
    %v72 = vpack.c.b16 %v69, %v68
    %v73 = vpack.c.b16 %v71, %v70
    %vm76 = vcmask 261120
    %v78 = vsel %vm76, %v54, 0
    %80 = vmatprep.subr.bf16.mxu0 0
    %81 = vmatpush1.bf16.msra.mxu0 %v72
    %82 = vmatprep.subr.bf16.mxu0 0
    %83 = vmatpush1.bf16.msra.mxu0 %v73
    %84 = vmatprep.subr.bf16.mxu0 0
    %85 = vmatpush1.bf16.msra.mxu0 0
    %86 = vmatprep.subr.bf16.mxu0 0
    %87 = vmatpush1.bf16.msra.mxu0 0
    %88 = vmatprep.subr.bf16.mxu0 0
    %89 = vmatpush1.bf16.msra.mxu0 0
    %90 = vmatprep.subr.bf16.mxu0 0
    %91 = vmatpush1.bf16.msra.mxu0 0
    %92 = vmatprep.subr.bf16.mxu0 0
    %93 = vmatpush1.bf16.msra.mxu0 0
    %94 = vmatprep.subr.bf16.mxu0 0
    %95 = vmatpush1.bf16.msra.mxu0 0
    %96 = vmatprep.subr.bf16.mxu0 0
    %97 = vmatpush1.bf16.msra.mxu0 0
    %98 = vmatprep.subr.bf16.mxu0 0
    %99 = vmatpush1.bf16.msra.mxu0 0
    %100 = vmatprep.subr.bf16.mxu0 0
    %101 = vmatpush1.bf16.msra.mxu0 0
    %102 = vmatprep.subr.bf16.mxu0 0
    %103 = vmatpush1.bf16.msra.mxu0 0
    %104 = vmatprep.subr.bf16.mxu0 0
    %105 = vmatpush1.bf16.msra.mxu0 0
    %106 = vmatprep.subr.bf16.mxu0 0
    %107 = vmatpush1.bf16.msra.mxu0 0
    %108 = vmatprep.subr.bf16.mxu0 0
    %109 = vmatpush1.bf16.msra.mxu0 0
    %110 = vmatprep.subr.bf16.mxu0 0
    %111 = vmatpush1.bf16.msra.mxu0 0
    %112 = vmatprep.mubr.bf16.mxu0 0
    %113 = vmatmul.mubr.bf16.gmra.mrb[0].mxu0 %v78
    %v114 = vpop.f32.mrb[0].mxu0
    %v115 = vadd.f32 %v63, %v114
    %v116 = vpop.f32.mrb[0].mxu0
    %v117 = vpop.f32.mrb[0].mxu0
    %v118 = vpop.f32.mrb[0].mxu0
    %119 = vdwg.mxu0
    %v120 = vmax.f32 %v115, 0.0
    %v121 = vpack.c.bf16 %v120, %v120
    %s122 = scalar_lea.vmem [#allocation5], 32
    %v123 = vld [vmem:[%s122] sm:$0xf]
    %v124 = vld [vmem:[%s122 + $0x4] sm:$0xf]
    %v125 = vld [vmem:[%s122 + $0x8] sm:$0xf]
    %v126 = vld [vmem:[%s122 + $0xc] sm:$0xf]
    %v127 = vld [vmem:[%s122 + $0x10] sm:$0xf]
    %v128 = vld [vmem:[%s122 + $0x14] sm:$0xf]
    %v129 = vld [vmem:[%s122 + $0x18] sm:$0xf]
    %v130 = vld [vmem:[%s122 + $0x1c] sm:$0xf]
    %v131 = vld [vmem:[#allocation7 + $0x1] sm:$0x1]
    %v132 = vlaneseq
    %v133 = vshrl.u32 %v132, 7
    %v134 = vsub.s32 0, %v133
    %v135 = vrot.slane %v131, %v134
    %v144 = vunpack.c.l.b16 %v123
    %v145 = vunpack.c.l.b16 %v124
    %v146 = vunpack.c.l.b16 %v125
    %v147 = vunpack.c.l.b16 %v126
    %v148 = vunpack.c.l.b16 %v127
    %v149 = vunpack.c.l.b16 %v128
    %v150 = vunpack.c.l.b16 %v129
    %v151 = vunpack.c.l.b16 %v130
    %v152 = vpack.c.b16 %v145, %v144
    %v153 = vpack.c.b16 %v147, %v146
    %v154 = vpack.c.b16 %v149, %v148
    %v155 = vpack.c.b16 %v151, %v150
    %vm160 = vcmask 523264
    %v162 = vsel %vm160, %v121, 0
    %164 = vmatprep.subr.bf16.mxu0 0
    %165 = vmatpush1.bf16.msra.mxu0 %v152
    %166 = vmatprep.subr.bf16.mxu0 0
    %167 = vmatpush1.bf16.msra.mxu0 %v153
    %168 = vmatprep.subr.bf16.mxu0 0
    %169 = vmatpush1.bf16.msra.mxu0 %v154
    %170 = vmatprep.subr.bf16.mxu0 0
    %171 = vmatpush1.bf16.msra.mxu0 %v155
    %172 = vmatprep.subr.bf16.mxu0 0
    %173 = vmatpush1.bf16.msra.mxu0 0
    %174 = vmatprep.subr.bf16.mxu0 0
    %175 = vmatpush1.bf16.msra.mxu0 0
    %176 = vmatprep.subr.bf16.mxu0 0
    %177 = vmatpush1.bf16.msra.mxu0 0
    %178 = vmatprep.subr.bf16.mxu0 0
    %179 = vmatpush1.bf16.msra.mxu0 0
    %180 = vmatprep.subr.bf16.mxu0 0
    %181 = vmatpush1.bf16.msra.mxu0 0
    %182 = vmatprep.subr.bf16.mxu0 0
    %183 = vmatpush1.bf16.msra.mxu0 0
    %184 = vmatprep.subr.bf16.mxu0 0
    %185 = vmatpush1.bf16.msra.mxu0 0
    %186 = vmatprep.subr.bf16.mxu0 0
    %187 = vmatpush1.bf16.msra.mxu0 0
    %188 = vmatprep.subr.bf16.mxu0 0
    %189 = vmatpush1.bf16.msra.mxu0 0
    %190 = vmatprep.subr.bf16.mxu0 0
    %191 = vmatpush1.bf16.msra.mxu0 0
    %192 = vmatprep.subr.bf16.mxu0 0
    %193 = vmatpush1.bf16.msra.mxu0 0
    %194 = vmatprep.subr.bf16.mxu0 0
    %195 = vmatpush1.bf16.msra.mxu0 0
    %196 = vmatprep.mubr.bf16.mxu0 0
    %197 = vmatmul.mubr.bf16.gmra.mrb[0].mxu0 %v162
    %v198 = vpop.f32.mrb[0].mxu0
    %v199 = vadd.f32 %v135, %v198
    %v200 = vpop.f32.mrb[0].mxu0
    %v201 = vpop.f32.mrb[0].mxu0
    %v202 = vpop.f32.mrb[0].mxu0
    %203 = vdwg.mxu0
    %v204 = vmax.f32 %v199, 0.0
    %v205 = vpack.c.bf16 %v204, %v204
    %s206 = scalar_lea.vmem [#allocation5], 64
    %v207 = vld [vmem:[%s206] sm:$0xf]
    %v208 = vld [vmem:[%s206 + $0x4] sm:$0xf]
    %v209 = vld [vmem:[%s206 + $0x8] sm:$0xf]
    %v210 = vld [vmem:[%s206 + $0xc] sm:$0xf]
    %v211 = vld [vmem:[%s206 + $0x10] sm:$0xf]
    %v212 = vld [vmem:[%s206 + $0x14] sm:$0xf]
    %v213 = vld [vmem:[%s206 + $0x18] sm:$0xf]
    %v214 = vld [vmem:[%s206 + $0x1c] sm:$0xf]
    %v215 = vld [vmem:[#allocation7 + $0x2] sm:$0x1]
    %v216 = vlaneseq
    %v217 = vshrl.u32 %v216, 7
    %v218 = vsub.s32 0, %v217
    %v219 = vrot.slane %v215, %v218
    %v228 = vunpack.c.l.b16 %v207
    %v229 = vunpack.c.l.b16 %v208
    %v230 = vunpack.c.l.b16 %v209
    %v231 = vunpack.c.l.b16 %v210
    %v232 = vunpack.c.l.b16 %v211
    %v233 = vunpack.c.l.b16 %v212
    %v234 = vunpack.c.l.b16 %v213
    %v235 = vunpack.c.l.b16 %v214
    %v236 = vpack.c.b16 %v229, %v228
    %v237 = vpack.c.b16 %v231, %v230
    %v238 = vpack.c.b16 %v233, %v232
    %v239 = vpack.c.b16 %v235, %v234
    %v245 = vsel %vm160, %v205, 0
    %247 = vmatprep.subr.bf16.mxu0 0
    %248 = vmatpush1.bf16.msra.mxu0 %v236
    %249 = vmatprep.subr.bf16.mxu0 0
    %250 = vmatpush1.bf16.msra.mxu0 %v237
    %251 = vmatprep.subr.bf16.mxu0 0
    %252 = vmatpush1.bf16.msra.mxu0 %v238
    %253 = vmatprep.subr.bf16.mxu0 0
    %254 = vmatpush1.bf16.msra.mxu0 %v239
    %255 = vmatprep.subr.bf16.mxu0 0
    %256 = vmatpush1.bf16.msra.mxu0 0
    %257 = vmatprep.subr.bf16.mxu0 0
    %258 = vmatpush1.bf16.msra.mxu0 0
    %259 = vmatprep.subr.bf16.mxu0 0
    %260 = vmatpush1.bf16.msra.mxu0 0
    %261 = vmatprep.subr.bf16.mxu0 0
    %262 = vmatpush1.bf16.msra.mxu0 0
    %263 = vmatprep.subr.bf16.mxu0 0
    %264 = vmatpush1.bf16.msra.mxu0 0
    %265 = vmatprep.subr.bf16.mxu0 0
    %266 = vmatpush1.bf16.msra.mxu0 0
    %267 = vmatprep.subr.bf16.mxu0 0
    %268 = vmatpush1.bf16.msra.mxu0 0
    %269 = vmatprep.subr.bf16.mxu0 0
    %270 = vmatpush1.bf16.msra.mxu0 0
    %271 = vmatprep.subr.bf16.mxu0 0
    %272 = vmatpush1.bf16.msra.mxu0 0
    %273 = vmatprep.subr.bf16.mxu0 0
    %274 = vmatpush1.bf16.msra.mxu0 0
    %275 = vmatprep.subr.bf16.mxu0 0
    %276 = vmatpush1.bf16.msra.mxu0 0
    %277 = vmatprep.subr.bf16.mxu0 0
    %278 = vmatpush1.bf16.msra.mxu0 0
    %279 = vmatprep.mubr.bf16.mxu0 0
    %280 = vmatmul.mubr.bf16.gmra.mrb[0].mxu0 %v245
    %v281 = vpop.f32.mrb[0].mxu0
    %v282 = vadd.f32 %v219, %v281
    %v283 = vpop.f32.mrb[0].mxu0
    %v284 = vpop.f32.mrb[0].mxu0
    %v285 = vpop.f32.mrb[0].mxu0
    %286 = vdwg.mxu0
    %v287 = vmul.f32 %v282, 0.5
    %v288 = vmul.f32 %v287, 1.442695
    %v289 = vpow.pop %v288
    %291 = vrot.lane.b32.xlu0 %v289, 8
    %v292 = vpop.permute.xlu0 %291
    %v294 = vmul.f32 %v53, %v292
    %296 = vrot.lane.b32.xlu0 %v294, 104
    %v297 = vpop.permute.xlu0 %296
    %v299 = vadd.f32 %v282, %v297
    %v300 = vpack.c.bf16 %v299, %v299
    %s301 = scalar_lea.vmem [#allocation5], 96
    %v302 = vld [vmem:[%s301] sm:$0xf]
    %v303 = vld [vmem:[%s301 + $0x4] sm:$0xf]
    %v304 = vld [vmem:[#allocation7 + $0x3] sm:$0x1]
    %v305 = vlaneseq
    %v306 = vshrl.u32 %v305, 7
    %v307 = vsub.s32 0, %v306
    %v308 = vrot.slane %v304, %v307
    %v311 = vunpack.c.l.b16 %v302
    %v312 = vunpack.c.l.b16 %v303
    %v313 = vpack.c.b16 %v312, %v311
    %vm315 = vcmask 130048
    %v317 = vsel %vm315, %v300, 0
    %319 = vmatprep.subr.bf16.mxu0 0
    %320 = vmatpush1.bf16.msra.mxu0 %v313
    %321 = vmatprep.subr.bf16.mxu0 0
    %322 = vmatpush1.bf16.msra.mxu0 0
    %323 = vmatprep.subr.bf16.mxu0 0
    %324 = vmatpush1.bf16.msra.mxu0 0
    %325 = vmatprep.subr.bf16.mxu0 0
    %326 = vmatpush1.bf16.msra.mxu0 0
    %327 = vmatprep.subr.bf16.mxu0 0
    %328 = vmatpush1.bf16.msra.mxu0 0
    %329 = vmatprep.subr.bf16.mxu0 0
    %330 = vmatpush1.bf16.msra.mxu0 0
    %331 = vmatprep.subr.bf16.mxu0 0
    %332 = vmatpush1.bf16.msra.mxu0 0
    %333 = vmatprep.subr.bf16.mxu0 0
    %334 = vmatpush1.bf16.msra.mxu0 0
    %335 = vmatprep.subr.bf16.mxu0 0
    %336 = vmatpush1.bf16.msra.mxu0 0
    %337 = vmatprep.subr.bf16.mxu0 0
    %338 = vmatpush1.bf16.msra.mxu0 0
    %339 = vmatprep.subr.bf16.mxu0 0
    %340 = vmatpush1.bf16.msra.mxu0 0
    %341 = vmatprep.subr.bf16.mxu0 0
    %342 = vmatpush1.bf16.msra.mxu0 0
    %343 = vmatprep.subr.bf16.mxu0 0
    %344 = vmatpush1.bf16.msra.mxu0 0
    %345 = vmatprep.subr.bf16.mxu0 0
    %346 = vmatpush1.bf16.msra.mxu0 0
    %347 = vmatprep.subr.bf16.mxu0 0
    %348 = vmatpush1.bf16.msra.mxu0 0
    %349 = vmatprep.subr.bf16.mxu0 0
    %350 = vmatpush1.bf16.msra.mxu0 0
    %351 = vmatprep.mubr.bf16.mxu0 0
    %352 = vmatmul.mubr.bf16.gmra.mrb[0].mxu0 %v317
    %v353 = vpop.f32.mrb[0].mxu0
    %v354 = vadd.f32 %v308, %v353
    %v355 = vpop.f32.mrb[0].mxu0
    %v356 = vpop.f32.mrb[0].mxu0
    %v357 = vpop.f32.mrb[0].mxu0
    %358 = vdwg.mxu0
    %v359 = vmax.f32 %v354, 0.0
    %v360 = vpack.c.bf16 %v359, %v359
    %s361 = scalar_lea.vmem [#allocation5], 128
    %v362 = vld [vmem:[%s361] sm:$0xf]
    %v363 = vld [vmem:[%s361 + $0x4] sm:$0xf]
    %v364 = vld [vmem:[%s361 + $0x8] sm:$0xf]
    %v365 = vld [vmem:[%s361 + $0xc] sm:$0xf]
    %v366 = vld [vmem:[%s361 + $0x10] sm:$0xf]
    %v367 = vld [vmem:[%s361 + $0x14] sm:$0xf]
    %v368 = vld [vmem:[%s361 + $0x18] sm:$0xf]
    %v369 = vld [vmem:[%s361 + $0x1c] sm:$0xf]
    %v370 = vld [vmem:[#allocation7 + $0x4] sm:$0x1]
    %v371 = vlaneseq
    %v372 = vshrl.u32 %v371, 7
    %v373 = vsub.s32 0, %v372
    %v374 = vrot.slane %v370, %v373
    %v383 = vunpack.c.l.b16 %v362
    %v384 = vunpack.c.l.b16 %v363
    %v385 = vunpack.c.l.b16 %v364
    %v386 = vunpack.c.l.b16 %v365
    %v387 = vunpack.c.l.b16 %v366
    %v388 = vunpack.c.l.b16 %v367
    %v389 = vunpack.c.l.b16 %v368
    %v390 = vunpack.c.l.b16 %v369
    %v391 = vpack.c.b16 %v384, %v383
    %v392 = vpack.c.b16 %v386, %v385
    %v393 = vpack.c.b16 %v388, %v387
    %v394 = vpack.c.b16 %v390, %v389
    %v400 = vsel %vm160, %v360, 0
    %402 = vmatprep.subr.bf16.mxu0 0
    %403 = vmatpush1.bf16.msra.mxu0 %v391
    %404 = vmatprep.subr.bf16.mxu0 0
    %405 = vmatpush1.bf16.msra.mxu0 %v392
    %406 = vmatprep.subr.bf16.mxu0 0
    %407 = vmatpush1.bf16.msra.mxu0 %v393
    %408 = vmatprep.subr.bf16.mxu0 0
    %409 = vmatpush1.bf16.msra.mxu0 %v394
    %410 = vmatprep.subr.bf16.mxu0 0
    %411 = vmatpush1.bf16.msra.mxu0 0
    %412 = vmatprep.subr.bf16.mxu0 0
    %413 = vmatpush1.bf16.msra.mxu0 0
    %414 = vmatprep.subr.bf16.mxu0 0
    %415 = vmatpush1.bf16.msra.mxu0 0
    %416 = vmatprep.subr.bf16.mxu0 0
    %417 = vmatpush1.bf16.msra.mxu0 0
    %418 = vmatprep.subr.bf16.mxu0 0
    %419 = vmatpush1.bf16.msra.mxu0 0
    %420 = vmatprep.subr.bf16.mxu0 0
    %421 = vmatpush1.bf16.msra.mxu0 0
    %422 = vmatprep.subr.bf16.mxu0 0
    %423 = vmatpush1.bf16.msra.mxu0 0
    %424 = vmatprep.subr.bf16.mxu0 0
    %425 = vmatpush1.bf16.msra.mxu0 0
    %426 = vmatprep.subr.bf16.mxu0 0
    %427 = vmatpush1.bf16.msra.mxu0 0
    %428 = vmatprep.subr.bf16.mxu0 0
    %429 = vmatpush1.bf16.msra.mxu0 0
    %430 = vmatprep.subr.bf16.mxu0 0
    %431 = vmatpush1.bf16.msra.mxu0 0
    %432 = vmatprep.subr.bf16.mxu0 0
    %433 = vmatpush1.bf16.msra.mxu0 0
    %434 = vmatprep.mubr.bf16.mxu0 0
    %435 = vmatmul.mubr.bf16.gmra.mrb[0].mxu0 %v400
    %v436 = vpop.f32.mrb[0].mxu0
    %v437 = vadd.f32 %v374, %v436
    %v438 = vpop.f32.mrb[0].mxu0
    %v439 = vpop.f32.mrb[0].mxu0
    %v440 = vpop.f32.mrb[0].mxu0
    %441 = vdwg.mxu0
    %v442 = vmax.f32 %v437, 0.0
    %v443 = vpack.c.bf16 %v442, %v442
    %s444 = scalar_lea.vmem [#allocation5], 160
    %v445 = vld [vmem:[%s444] sm:$0xf]
    %v446 = vld [vmem:[%s444 + $0x4] sm:$0xf]
    %v447 = vld [vmem:[%s444 + $0x8] sm:$0xf]
    %v448 = vld [vmem:[%s444 + $0xc] sm:$0xf]
    %v449 = vld [vmem:[%s444 + $0x10] sm:$0xf]
    %v450 = vld [vmem:[%s444 + $0x14] sm:$0xf]
    %v451 = vld [vmem:[%s444 + $0x18] sm:$0xf]
    %v452 = vld [vmem:[%s444 + $0x1c] sm:$0xf]
    %v453 = vld [vmem:[#allocation7 + $0x5] sm:$0x1]
    %v454 = vlaneseq
    %v455 = vshrl.u32 %v454, 7
    %v456 = vsub.s32 0, %v455
    %v457 = vrot.slane %v453, %v456
    %v466 = vunpack.c.l.b16 %v445
    %v467 = vunpack.c.l.b16 %v446
    %v468 = vunpack.c.l.b16 %v447
    %v469 = vunpack.c.l.b16 %v448
    %v470 = vunpack.c.l.b16 %v449
    %v471 = vunpack.c.l.b16 %v450
    %v472 = vunpack.c.l.b16 %v451
    %v473 = vunpack.c.l.b16 %v452
    %v474 = vpack.c.b16 %v467, %v466
    %v475 = vpack.c.b16 %v469, %v468
    %v476 = vpack.c.b16 %v471, %v470
    %v477 = vpack.c.b16 %v473, %v472
    %v483 = vsel %vm160, %v443, 0
    %485 = vmatprep.subr.bf16.mxu0 0
    %486 = vmatpush1.bf16.msra.mxu0 %v474
    %487 = vmatprep.subr.bf16.mxu0 0
    %488 = vmatpush1.bf16.msra.mxu0 %v475
    %489 = vmatprep.subr.bf16.mxu0 0
    %490 = vmatpush1.bf16.msra.mxu0 %v476
    %491 = vmatprep.subr.bf16.mxu0 0
    %492 = vmatpush1.bf16.msra.mxu0 %v477
    %493 = vmatprep.subr.bf16.mxu0 0
    %494 = vmatpush1.bf16.msra.mxu0 0
    %495 = vmatprep.subr.bf16.mxu0 0
    %496 = vmatpush1.bf16.msra.mxu0 0
    %497 = vmatprep.subr.bf16.mxu0 0
    %498 = vmatpush1.bf16.msra.mxu0 0
    %499 = vmatprep.subr.bf16.mxu0 0
    %500 = vmatpush1.bf16.msra.mxu0 0
    %501 = vmatprep.subr.bf16.mxu0 0
    %502 = vmatpush1.bf16.msra.mxu0 0
    %503 = vmatprep.subr.bf16.mxu0 0
    %504 = vmatpush1.bf16.msra.mxu0 0
    %505 = vmatprep.subr.bf16.mxu0 0
    %506 = vmatpush1.bf16.msra.mxu0 0
    %507 = vmatprep.subr.bf16.mxu0 0
    %508 = vmatpush1.bf16.msra.mxu0 0
    %509 = vmatprep.subr.bf16.mxu0 0
    %510 = vmatpush1.bf16.msra.mxu0 0
    %511 = vmatprep.subr.bf16.mxu0 0
    %512 = vmatpush1.bf16.msra.mxu0 0
    %513 = vmatprep.subr.bf16.mxu0 0
    %514 = vmatpush1.bf16.msra.mxu0 0
    %515 = vmatprep.subr.bf16.mxu0 0
    %516 = vmatpush1.bf16.msra.mxu0 0
    %517 = vmatprep.mubr.bf16.mxu0 0
    %518 = vmatmul.mubr.bf16.gmra.mrb[0].mxu0 %v483
    %v519 = vpop.f32.mrb[0].mxu0
    %v520 = vadd.f32 %v457, %v519
    %v521 = vpop.f32.mrb[0].mxu0
    %v522 = vpop.f32.mrb[0].mxu0
    %v523 = vpop.f32.mrb[0].mxu0
    %524 = vdwg.mxu0
    %526 = vrot.lane.b32.xlu0 %v282, 24
    %v527 = vpop.permute.xlu0 %526
    %vm529 = vcmask 195584
    %v530 = vsel %vm529, %v520, %v527
    %vm531 = vcmask 457728
    %532 = vst.msk [vmem:[#allocation8] sm:$0xff] %vm531, %v530
    // Predicated region
    $region26: #{tpu_custom_call.1} parent=1 // pred_check
      _
    $region27: #{tpu_custom_call.1} parent=1 // pred_check_branch
      %534 = sbr.rel (0) target = $region29
    $region28: #{tpu_custom_call.1} parent=1 // pred_region
      %s536 = ssub.s32 128, 128
      %537 = vsyncadd [#allocation4], %s536
      %s539 = sshll.u32 [#allocation8], 4
      %s540 = int_to_ptr.vmem [resolvable:$true] %s539
      %542 = dma.vmem_to_hbm [thread:$0]  %s540, 128, %s3, [#allocation4]
    $region29: #{tpu_custom_call.1} parent=1 // pred_fallthru
      _
    // Predicated region
    $region30: #{tpu_custom_call.1} parent=1 // pred_check
      _
    $region31: #{tpu_custom_call.1} parent=1 // pred_check_branch
      %544 = sbr.rel (0) target = $region33
    $region32: #{tpu_custom_call.1} parent=1 // pred_region
      %545 = dma.done [#allocation4], 128
    $region33: #{tpu_custom_call.1} parent=1 // pred_fallthru
      _
    %546 = vsyncpa [#allocation3], 1
    %547 = vsyncpa [#allocation6], 1
    %548 = vsyncpa [#allocation4], 1

</llo_original>
